<compile_context>
chip_gen: v6e
topology: v6e:2x2x1
jax: 0.10.0
libtpu: 0.0.40
codegen_flags: <defaults>
</compile_context>

<pallas_src>
import functools

import jax
import jax.numpy as jnp
from jax.experimental import pallas as pl
from jax.experimental.pallas import tpu as pltpu

_LANE = 128
_VMEM_TILE_BUDGET = 24 * 1024 * 1024   # double-buffered tile footprint target (fits v7x)
_VMEM_LIMIT_BYTES = 32 * 1024 * 1024   # raise v5e's 16 MiB scoped default; safe on v6e/v7x
_FAST_PATH_FLOPS = 2 * (1 << 20)       # below this a fused XLA dot beats pallas_call overhead


def _round_up(x: int, m: int) -> int:
    return (x + m - 1) // m * m


def _sublane_pack(dtype) -> int:
    # Rows per packed vreg sublane group: f32 -> 8, bf16 -> 16, int8/fp8 -> 32.
    return max(8, 32 // jnp.dtype(dtype).itemsize)


def _maybe_cast(v, dtype):
    return v if dtype is None else v.astype(dtype)


def _kernel_2d(x_ref, wt_ref, o_ref, *, compute_dtype):
    # K is un-tiled: one MXU matmul per output tile, no accumulator / init / finalize.
    o_ref[...] = jnp.dot(
        _maybe_cast(x_ref[...], compute_dtype),
        _maybe_cast(wt_ref[...], compute_dtype),
        preferred_element_type=jnp.float32,
    ).astype(o_ref.dtype)


def _kernel_3d(x_ref, wt_ref, o_ref, acc_ref, *, compute_dtype):
    # K tiled: accumulate in f32 VMEM scratch, write out on the last K step.
    @pl.when(pl.program_id(2) == 0)
    def _():
        acc_ref[...] = jnp.zeros_like(acc_ref)

    acc_ref[...] += jnp.dot(
        _maybe_cast(x_ref[...], compute_dtype),
        _maybe_cast(wt_ref[...], compute_dtype),
        preferred_element_type=jnp.float32,
    )

    @pl.when(pl.program_id(2) == pl.num_programs(2) - 1)
    def _():
        o_ref[...] = acc_ref[...].astype(o_ref.dtype)


def prepare_weight(weight: jax.Array) -> jax.Array:
    """Pre-transpose (and lane-pad) the nn.Linear weight once.

    PyTorch stores the weight as (out_features, in_features); the kernel wants
    (in, out) so the MXU contraction is a plain NN matmul with no per-tile
    transposes.  The feature dim is zero-padded up to a multiple of 128 so the
    kernel never needs a full-extent, non-lane-aligned weight block.  Call this
    once and reuse the result across forward calls.
    """
    d_out, d_in = weight.shape
    assert d_out == d_in, "Linear_Generator uses a square weight"
    dp = _round_up(d_in, _LANE)
    wt = weight.T
    if dp != d_in:
        wt = jnp.pad(wt, ((0, dp - d_in), (0, dp - d_out)))
    return wt


def linear_generator_forward(
    ent_batch: jax.Array,
    weight_t: jax.Array,
    *,
    compute_dtype=jnp.bfloat16,
    interpret: bool = False,
) -> jax.Array:
    """ent_batch: (B, D); weight_t: prepare_weight(weight) of shape (Dp, Dp).

    compute_dtype: precision the MXU sees (accumulation is always f32). bf16 gives
    2-4x MXU throughput on all generations; pass None to feed operands at their
    stored precision.
    """
    B, D = ent_batch.shape
    Dp = weight_t.shape[0]
    assert weight_t.shape == (Dp, Dp) and Dp >= D and Dp % _LANE == 0

    # Tiny-problem fast path: pallas_call launch/pipeline overhead (~us) dominates.
    if 2 * B * D * D < _FAST_PATH_FLOPS:
        out = jnp.dot(
            _maybe_cast(ent_batch, compute_dtype),
            _maybe_cast(weight_t[:D, :D], compute_dtype),
            preferred_element_type=jnp.float32,
        )
        return out.astype(ent_batch.dtype)

    x = ent_batch
    if Dp != D:  # zero-pad K so reduction blocks are never partial (required for the dot)
        x = jnp.pad(x, ((0, 0), (0, Dp - D)))

    x_item = x.dtype.itemsize
    w_item = weight_t.dtype.itemsize
    o_item = ent_batch.dtype.itemsize

    pack = _sublane_pack(ent_batch.dtype)
    tm = min(512, _round_up(B, pack))

    # ---- Preferred: 2-D grid with K un-tiled (no accumulator, no K axis). ----
    tn = None
    for cand in (1024, 512, 256, 128):
        if Dp % cand:
            continue
        fp = 2 * (tm * Dp * x_item + Dp * cand * w_item + tm * cand * o_item)
        if fp <= _VMEM_TILE_BUDGET:
            tn = cand
            break

    if tn is not None:
        Bt, Nt = pl.cdiv(B, tm), Dp // tn
        # v7x shards the parallel grid axes over 2 TensorCores: make sure tiny
        # shapes still expose >= 2 parallel blocks.
        if Bt * Nt < 2:
            if tn > _LANE:
                tn //= 2
            elif tm > pack:
                tm = max(pack, _round_up(tm // 2, pack))
            Bt, Nt = pl.cdiv(B, tm), Dp // tn

        x_bytes, w_bytes = B * Dp * x_item, Dp * Dp * w_item
        out_bytes = B * Dp * o_item
        # Loop-order choice: keep the stream whose re-reads would cost more resident.
        #   weight-outer: W streamed exactly once, x re-read Nt times.
        #   batch-outer : x streamed exactly once, W re-read Bt times.
        traffic_w_outer = w_bytes + x_bytes * Nt
        traffic_b_outer = x_bytes + w_bytes * Bt
        if traffic_w_outer <= traffic_b_outer:
            grid = (Nt, Bt)
            x_spec = pl.BlockSpec((tm, Dp), lambda j, i: (i, 0))
            w_spec = pl.BlockSpec((Dp, tn), lambda j, i: (0, j))   # revisited across i
            o_spec = pl.BlockSpec((tm, tn), lambda j, i: (i, j))
            bytes_accessed = traffic_w_outer + out_bytes
        else:
            grid = (Bt, Nt)
            x_spec = pl.BlockSpec((tm, Dp), lambda i, j: (i, 0))   # revisited across j
            w_spec = pl.BlockSpec((Dp, tn), lambda i, j: (0, j))
            o_spec = pl.BlockSpec((tm, tn), lambda i, j: (i, j))
            bytes_accessed = traffic_b_outer + out_bytes

        out = pl.pallas_call(
            functools.partial(_kernel_2d, compute_dtype=compute_dtype),
            out_shape=jax.ShapeDtypeStruct((B, Dp), ent_batch.dtype),
            grid_spec=pltpu.PrefetchScalarGridSpec(
                num_scalar_prefetch=0,
                grid=grid,
                in_specs=[x_spec, w_spec],
                out_specs=o_spec,
            ),
            compiler_params=pltpu.CompilerParams(
                dimension_semantics=("parallel", "parallel"),
                vmem_limit_bytes=_VMEM_LIMIT_BYTES,
            ),
            cost_estimate=pl.CostEstimate(
                flops=2 * B * Dp * Dp,
                transcendentals=0,
                bytes_accessed=bytes_accessed,
            ),
            interpret=interpret,
        )(x, weight_t)
    else:
        # ---- Fallback: 3-D grid, K tiled last ("arbitrary"), f32 VMEM accumulator. ----
        tn = tk = next(c for c in (1024, 512, 256, 128) if Dp % c == 0)
        while True:
            fp = (2 * (tm * tk * x_item + tk * tn * w_item + tm * tn * o_item)
                  + tm * tn * 4)
            if fp <= _VMEM_TILE_BUDGET:
                break
            if tk > _LANE:
                tk //= 2
            elif tn > _LANE:
                tn //= 2
            elif tm > pack:
                tm = max(pack, _round_up(tm // 2, pack))
            else:
                break
        Bt, Nt, Kt = pl.cdiv(B, tm), Dp // tn, Dp // tk
        if Bt * Nt < 2 and tn > _LANE:   # keep both v7x TensorCores busy
            tn //= 2
            Nt = Dp // tn

        out = pl.pallas_call(
            functools.partial(_kernel_3d, compute_dtype=compute_dtype),
            out_shape=jax.ShapeDtypeStruct((B, Dp), ent_batch.dtype),
            grid_spec=pltpu.PrefetchScalarGridSpec(
                num_scalar_prefetch=0,
                grid=(Bt, Nt, Kt),
                in_specs=[
                    pl.BlockSpec((tm, tk), lambda i, j, k: (i, k)),
                    pl.BlockSpec((tk, tn), lambda i, j, k: (k, j)),
                ],
                out_specs=pl.BlockSpec((tm, tn), lambda i, j, k: (i, j)),
                scratch_shapes=[pltpu.VMEM((tm, tn), jnp.float32)],
            ),
            compiler_params=pltpu.CompilerParams(
                dimension_semantics=("parallel", "parallel", "arbitrary"),
                vmem_limit_bytes=_VMEM_LIMIT_BYTES,
            ),
            cost_estimate=pl.CostEstimate(
                flops=2 * B * Dp * Dp,
                transcendentals=0,
                bytes_accessed=(B * Dp * x_item * Nt
                                + Dp * Dp * w_item * Bt
                                + B * Dp * o_item),
            ),
            interpret=interpret,
        )(x, weight_t)

    if Dp != D:
        out = out[:, :D]
    return out


def _orthogonal_init(key, dim):
    # Deterministic stand-in for nn.init.orthogonal: QR of a Gaussian matrix.
    a = jax.random.normal(key, (dim, dim), dtype=jnp.float32)
    q, r = jnp.linalg.qr(a)
    return q * jnp.sign(jnp.diag(r))[None, :]


if __name__ == "__main__":
    dimension = 256
    batchsize = 64

    key = jax.random.PRNGKey(0)
    k_x, k_w = jax.random.split(key)

    ent_batch = jax.random.normal(k_x, (batchsize, dimension), dtype=jnp.float32)
    weight = _orthogonal_init(k_w, dimension)        # PyTorch (out_features, in_features) layout

    weight_t = prepare_weight(weight)                # cache W^T once, reused across forward calls
    fwd = jax.jit(linear_generator_forward)
    out = jax.block_until_ready(fwd(ent_batch, weight_t))

    assert out.shape == (batchsize, dimension)
    assert out.dtype == ent_batch.dtype

    # Reference with the same MXU input precision (bf16 operands, f32 accumulation).
    xq = ent_batch.astype(jnp.bfloat16).astype(jnp.float32)
    wq = weight.T.astype(jnp.bfloat16).astype(jnp.float32)
    ref = jnp.dot(xq, wq, preferred_element_type=jnp.float32)
    assert jnp.allclose(out, ref, atol=1e-3, rtol=1e-3)

    # Loose sanity bound against the exact f32 linear transform (bf16 operand rounding only).
    ref_f32 = jnp.dot(ent_batch, weight.T, precision=jax.lax.Precision.HIGHEST)
    assert jnp.allclose(out, ref_f32, atol=5e-2, rtol=5e-2)

    print("KERNEL_OK")
</pallas_src>

<mosaic_0001>
module attributes {stable_mosaic.version = 11 : i64} {
  func.func @_kernel_2d(%arg0: i32, %arg1: i32, %arg2: memref<64x256xf32, #tpu.memory_space<vmem>>, %arg3: memref<256x128xf32, #tpu.memory_space<vmem>>, %arg4: memref<64x128xf32, #tpu.memory_space<vmem>>) attributes {dimension_semantics = [#tpu.dimension_semantics<parallel>, #tpu.dimension_semantics<parallel>], iteration_bounds = array<i64: 1, 2>, scalar_prefetch = 0 : i64, scratch_operands = 0 : i64, tpu.core_type = #tpu.core_type<tc>, window_params = [{transform_indices = @transform_0, window_bounds = array<i64: 64, 256>}, {transform_indices = @transform_1, window_bounds = array<i64: 256, 128>}, {transform_indices = @transform_2, window_bounds = array<i64: 64, 128>}]} {
    %c0 = arith.constant 0 : index
    %c0_0 = arith.constant 0 : index
    %0 = vector.load %arg2[%c0, %c0_0] : memref<64x256xf32, #tpu.memory_space<vmem>>, vector<64x256xf32>
    %1 = arith.truncf %0 : vector<64x256xf32> to vector<64x256xbf16>
    %c0_1 = arith.constant 0 : index
    %c0_2 = arith.constant 0 : index
    %2 = vector.load %arg3[%c0_1, %c0_2] : memref<256x128xf32, #tpu.memory_space<vmem>>, vector<256x128xf32>
    %3 = arith.truncf %2 : vector<256x128xf32> to vector<256x128xbf16>
    %cst = arith.constant dense<0.000000e+00> : vector<64x128xf32>
    %4 = tpu.matmul %1, %3, %cst {dimension_numbers = #tpu.dot_dimension_numbers<[1], [0], [0], [1], [0, 0, 1, 1], [], []>} : vector<64x256xbf16>, vector<256x128xbf16>, vector<64x128xf32> -> vector<64x128xf32>
    %c0_3 = arith.constant 0 : index
    %c0_4 = arith.constant 0 : index
    %5 = vector.load %arg4[%c0_3, %c0_4] : memref<64x128xf32, #tpu.memory_space<vmem>>, vector<64x128xf32>
    tpu.vector_store %arg4[%c0_3, %c0_4], %4 {strides = array<i32>} : memref<64x128xf32, #tpu.memory_space<vmem>>, vector<64x128xf32>,
    return
  }
  func.func @transform_0(%arg0: i32, %arg1: i32) -> (i32, i32) {
    %c0_i32 = arith.constant 0 : i32
    %c0_i32_0 = arith.constant 0 : i32
    return %arg0, %c0_i32 : i32, i32
  }
  func.func @transform_1(%arg0: i32, %arg1: i32) -> (i32, i32) {
    %c0_i32 = arith.constant 0 : i32
    %c0_i32_0 = arith.constant 0 : i32
    return %c0_i32, %arg1 : i32, i32
  }
  func.func @transform_2(%arg0: i32, %arg1: i32) -> (i32, i32) {
    %c0_i32 = arith.constant 0 : i32
    return %arg0, %arg1 : i32, i32
  }
}

</mosaic_0001>

<llo_original>
// kernel: linear_generator_forward.1
$region0: #{linear_generator_forward.1}
  #allocation0 [shape = 'u32[]', space=smem, size = 0x4, offset = 0x4, fixed_abs, tag = 'smem constant byte address 0x4 - core index']
  #allocation1 [shape = 'u32[144,128]{1,0:T(1,128)}', space=vmem, size = 0x12000, scoped, tag = 'internal scratch']
  %s0 = inlined_call_operand.hbm [shape: f32[64,256], index: 0, kind: input, shape index: {}]
  %s1 = inlined_call_operand.hbm [shape: f32[256,256], index: 1, kind: input, shape index: {}]
  %s2 = inlined_call_operand.hbm [shape: f32[64,256], index: 2, kind: output, shape index: {}]
  %s3 = sld [smem:[#allocation0]]
  $region49: #{linear_generator_forward.1} parent=0
    _
  %s5 = ssub.s32 1, %s3
  %s6 = scalar_select 0, %s5, %s3
  $region1: #{linear_generator_forward.1} parent=0
    #allocation2 [shape = 'u8[65536]{0}', space=vmem, size = 0x10000, scoped, tag = 'input window, operand 0, single buffered']
    #allocation3 [shape = 's32[2]{0}', space=sflag, size = 0x8, scoped, tag = 'scoped memory for linear_generator_forward.1']
    #allocation4 [shape = 's32[2]{0}', space=sflag, size = 0x8, scoped, tag = 'scoped memory for linear_generator_forward.1']
    #allocation5 [shape = 'u8[262144]{0}', space=vmem, size = 0x40000, scoped, tag = 'input window, operand 1']
    #allocation6 [shape = 's32[2]{0}', space=sflag, size = 0x8, scoped, tag = 'scoped memory for linear_generator_forward.1']
    #allocation7 [shape = 'u8[65536]{0}', space=vmem, size = 0x10000, scoped, tag = 'output window, operand 0']
    %7 = vsyncpa [#allocation3], 0
    %8 = vsyncpa [#allocation6], 0
    %s9 = scalar_lea.sflag [#allocation6], 1
    %10 = vsyncpa %s9, 0
    %11 = vsyncpa [#allocation4], 0
    %s12 = scalar_lea.sflag [#allocation4], 1
    %13 = vsyncpa %s12, 0
    loop: start=0, step=1, limit=4
    $region2: #{linear_generator_forward.1} parent=1 // loop_pre_header
      _
    $region3: #{linear_generator_forward.1} parent=1 // loop_header
      %s15 = sphi 0, %s19
      %p16 = scmp.ge.s32.totalorder %s15, 4
      %s22 = sphi 0, %s34
      %s23 = sphi 0, %s30
      %s24 = sphi 0, %s22
      %s25 = sphi 0, %s23
      %s26 = sphi 0, %s24
      %s27 = sphi 0, %s25
      %s37 = sphi 0, %s39
      %s40 = sphi 0, %s37
      %s41 = sphi 0, %s40
      %s57 = sphi 0, %s41
      %s63 = sphi 0, %s65
      %s66 = sphi 0, %s63
      %s67 = sphi 0, %s66
      %s83 = sphi 0, %s67
      %s91 = sphi 0, %s93
      %s94 = sphi 0, %s91
      %s95 = sphi 0, %s94
      %s111 = sphi 0, %s95
    $region4: #{linear_generator_forward.1} parent=1 // loop_header_branch
      %18 = sbr.rel (%p16) target = $region8
    $region5: #{linear_generator_forward.1} parent=1 // loop_body
      %s20 = ssub.s32 %s15, 1
      %s21 = ssub.s32 %s15, 2
      %s28 = sadd.s32 1, %s23
      %p29 = scmp.ge.s32.totalorder %s28, 2
      %s30 = scalar_select %p29, 0, %s28
      %s31 = sadd.s32 1, %s22
      %s32 = scalar_select %p29, %s31, %s22
      %p33 = scmp.ge.s32.totalorder %s32, 1
      %s34 = scalar_select %p33, 0, %s32
      %s35 = ssub.s32 %s22, %s34
      %p36 = scmp.eq.s32.totalorder %s35, 0
      %s38 = sadd.s32 %s37, 1
      %s39 = scalar_select %p36, %s37, %s38
      %p42 = pneg %p36
      %p43 = scmp.eq.s32.totalorder %s15, 1
      %p44 = por %p42, %p43
      %p45 = scmp.ne.s32.totalorder %s37, %s40
      %p46 = scmp.eq.s32.totalorder %s15, 0
      %p47 = por %p45, %p46
      %p48 = scmp.ne.s32.totalorder %s37, %s40
      %p49 = scmp.eq.s32.totalorder %s20, 1
      %p50 = por %p48, %p49
      %p51 = scmp.ne.s32.totalorder %s40, %s41
      %p52 = scmp.eq.s32.totalorder %s20, 0
      %p53 = por %p51, %p52
      %p54 = scmp.ne.s32.totalorder %s40, %s41
      %p55 = scmp.eq.s32.totalorder %s21, 1
      %p56 = por %p54, %p55
      %p58 = scmp.ne.s32.totalorder %s41, %s57
      %p59 = scmp.eq.s32.totalorder %s21, 0
      %p60 = por %p58, %p59
      %s61 = ssub.s32 %s23, %s30
      %p62 = scmp.eq.s32.totalorder %s61, 0
      %s64 = sadd.s32 %s63, 1
      %s65 = scalar_select %p62, %s63, %s64
      %p68 = pneg %p62
      %p69 = scmp.eq.s32.totalorder %s15, 1
      %p70 = por %p68, %p69
      %p71 = scmp.ne.s32.totalorder %s63, %s66
      %p72 = scmp.eq.s32.totalorder %s15, 0
      %p73 = por %p71, %p72
      %p74 = scmp.ne.s32.totalorder %s63, %s66
      %p75 = scmp.eq.s32.totalorder %s20, 1
      %p76 = por %p74, %p75
      %p77 = scmp.ne.s32.totalorder %s66, %s67
      %p78 = scmp.eq.s32.totalorder %s20, 0
      %p79 = por %p77, %p78
      %p80 = scmp.ne.s32.totalorder %s66, %s67
      %p81 = scmp.eq.s32.totalorder %s21, 1
      %p82 = por %p80, %p81
      %p84 = scmp.ne.s32.totalorder %s67, %s83
      %p85 = scmp.eq.s32.totalorder %s21, 0
      %p86 = por %p84, %p85
      %s87 = ssub.s32 %s22, %s34
      %s88 = ssub.s32 %s23, %s30
      %s89 = sor.u32 %s87, %s88
      %p90 = scmp.eq.s32.totalorder %s89, 0
      %s92 = sadd.s32 %s91, 1
      %s93 = scalar_select %p90, %s91, %s92
      %p96 = pneg %p90
      %p97 = scmp.eq.s32.totalorder %s15, 1
      %p98 = por %p96, %p97
      %p99 = scmp.ne.s32.totalorder %s91, %s94
      %p100 = scmp.eq.s32.totalorder %s15, 0
      %p101 = por %p99, %p100
      %p102 = scmp.ne.s32.totalorder %s91, %s94
      %p103 = scmp.eq.s32.totalorder %s20, 1
      %p104 = por %p102, %p103
      %p105 = scmp.ne.s32.totalorder %s94, %s95
      %p106 = scmp.eq.s32.totalorder %s20, 0
      %p107 = por %p105, %p106
      %p108 = scmp.ne.s32.totalorder %s94, %s95
      %p109 = scmp.eq.s32.totalorder %s21, 1
      %p110 = por %p108, %p109
      %p112 = scmp.ne.s32.totalorder %s95, %s111
      %p113 = scmp.eq.s32.totalorder %s21, 0
      %p114 = por %p112, %p113
      %p115 = scmp.le.s32.totalorder 1, %s15
      %p116 = scmp.lt.s32.totalorder %s15, 3
      %p117 = pnand %p115, %p116
      %p118 = pneg %p117
      // Predicated region
      $region9: #{linear_generator_forward.1} parent=5 // pred_check
        _
      $region10: #{linear_generator_forward.1} parent=5 // pred_check_branch
        %120 = sbr.rel (%p117) target = $region12
      $region11: #{linear_generator_forward.1} parent=5 // pred_region
        %s121 = ssub.s32 %s15, 1
        // Predicated region
        $region13: #{linear_generator_forward.1} parent=11 // pred_check
          %p122 = pneg %p53
        $region14: #{linear_generator_forward.1} parent=11 // pred_check_branch
          %124 = sbr.rel (%p122) target = $region16
        $region15: #{linear_generator_forward.1} parent=11 // pred_region
          %s125 = smul.u32 8, %s24
          %s127 = ssub.s32 2048, 2048
          %128 = vsyncadd [#allocation3], %s127
          %s129 = smul.addr %s125, 2
          %s130 = smul.addr %s129, 128
          %s131 = scalar_lea.hbm %s0, %s130
          %s132 = sshll.u32 [#allocation2], 4
          %s133 = int_to_ptr.vmem [resolvable:$true] %s132
          %138 = dma.hbm_to_vmem [thread:$0]  %s131, 2048, %s133, [#allocation3], 256, 256, 16
        $region16: #{linear_generator_forward.1} parent=11 // pred_fallthru
          _
      $region12: #{linear_generator_forward.1} parent=5 // pred_fallthru
        _
      %p139 = scmp.lt.s32.totalorder %s15, 2
      // Predicated region
      $region17: #{linear_generator_forward.1} parent=5 // pred_check
        %p140 = pneg %p139
      $region18: #{linear_generator_forward.1} parent=5 // pred_check_branch
        %142 = sbr.rel (%p140) target = $region20
      $region19: #{linear_generator_forward.1} parent=5 // pred_region
        // Predicated region
        $region21: #{linear_generator_forward.1} parent=19 // pred_check
          %p143 = pneg %p73
        $region22: #{linear_generator_forward.1} parent=19 // pred_check_branch
          %145 = sbr.rel (%p143) target = $region24
        $region23: #{linear_generator_forward.1} parent=19 // pred_region
          %s146 = sand.u32 %s63, 1
          %s147 = scalar_lea.sflag [#allocation6], %s146
          %s148 = sand.u32 %s63, 1
          %s149 = smul.addr %s148, 256
          %s150 = scalar_lea.vmem [#allocation5], %s149
          %s152 = ssub.s32 4096, 4096
          %153 = vsyncadd %s147, %s152
          %s154 = smul.addr %s23, 128
          %s155 = scalar_lea.hbm %s1, %s154
          %s156 = sshll.u32 %s150, 4
          %s157 = int_to_ptr.vmem [resolvable:$true] %s156
          %162 = dma.hbm_to_vmem [thread:$0]  %s155, 4096, %s157, %s147, 256, 128, 8
        $region24: #{linear_generator_forward.1} parent=19 // pred_fallthru
          _
      $region20: #{linear_generator_forward.1} parent=5 // pred_fallthru
        _
      %p163 = scmp.le.s32.totalorder 1, %s15
      %p164 = scmp.lt.s32.totalorder %s15, 3
      %p165 = pnand %p163, %p164
      %p166 = pneg %p165
      // Predicated region
      $region25: #{linear_generator_forward.1} parent=5 // pred_check
        _
      $region26: #{linear_generator_forward.1} parent=5 // pred_check_branch
        %168 = sbr.rel (%p165) target = $region28
      $region27: #{linear_generator_forward.1} parent=5 // pred_region
        %s169 = ssub.s32 %s15, 1
        // Predicated region
        $region29: #{linear_generator_forward.1} parent=27 // pred_check
          %p170 = pneg %p53
        $region30: #{linear_generator_forward.1} parent=27 // pred_check_branch
          %172 = sbr.rel (%p170) target = $region32
        $region31: #{linear_generator_forward.1} parent=27 // pred_region
          %173 = dma.done [#allocation3], 2048
        $region32: #{linear_generator_forward.1} parent=27 // pred_fallthru
          _
        %s174 = sand.u32 %s66, 1
        %s175 = scalar_lea.sflag [#allocation6], %s174
        %s176 = sand.u32 %s66, 1
        %s177 = smul.addr %s176, 256
        %s178 = scalar_lea.vmem [#allocation5], %s177
        // Predicated region
        $region33: #{linear_generator_forward.1} parent=27 // pred_check
          %p179 = pneg %p79
        $region34: #{linear_generator_forward.1} parent=27 // pred_check_branch
          %181 = sbr.rel (%p179) target = $region36
        $region35: #{linear_generator_forward.1} parent=27 // pred_region
          %182 = dma.done %s175, 4096
        $region36: #{linear_generator_forward.1} parent=27 // pred_fallthru
          _
        %p183 = pneg %p53
        %p184 = pneg %p50
        %s185 = sand.u32 %s66, 1
        %s186 = scalar_lea.sflag [#allocation6], %s185
        %s187 = sand.u32 %s66, 1
        %s188 = smul.addr %s187, 256
        %s189 = scalar_lea.vmem [#allocation5], %s188
        %p190 = pneg %p79
        %p191 = pneg %p76
        %p192 = pneg %p107
        %p193 = pneg %p104
        %s194 = sand.u32 %s94, 1
        %s195 = scalar_lea.sflag [#allocation4], %s194
        %s196 = sand.u32 %s94, 1
        %s197 = smul.addr %s196, 64
        %s198 = scalar_lea.vmem [#allocation7], %s197
        %s199 = smul.u32 8, %s24
        %s200 = smul.u32 8, %s24
        %v202 = vld [vmem:[#allocation2] sm:$0xff]
        %v203 = vld [vmem:[#allocation2 + $0x8] sm:$0xff]
        %v204 = vld [vmem:[#allocation2 + $0x10] sm:$0xff]
        %v205 = vld [vmem:[#allocation2 + $0x18] sm:$0xff]
        %v206 = vld [vmem:[#allocation2 + $0x20] sm:$0xff]
        %v207 = vld [vmem:[#allocation2 + $0x28] sm:$0xff]
        %v208 = vld [vmem:[#allocation2 + $0x30] sm:$0xff]
        %v209 = vld [vmem:[#allocation2 + $0x38] sm:$0xff]
        %v210 = vld [vmem:[#allocation2 + $0x40] sm:$0xff]
        %v211 = vld [vmem:[#allocation2 + $0x48] sm:$0xff]
        %v212 = vld [vmem:[#allocation2 + $0x50] sm:$0xff]
        %v213 = vld [vmem:[#allocation2 + $0x58] sm:$0xff]
        %v214 = vld [vmem:[#allocation2 + $0x60] sm:$0xff]
        %v215 = vld [vmem:[#allocation2 + $0x68] sm:$0xff]
        %v216 = vld [vmem:[#allocation2 + $0x70] sm:$0xff]
        %v217 = vld [vmem:[#allocation2 + $0x78] sm:$0xff]
        %v218 = vpack.c.bf16 %v204, %v202
        %v219 = vpack.c.bf16 %v205, %v203
        %v220 = vpack.c.bf16 %v208, %v206
        %v221 = vpack.c.bf16 %v209, %v207
        %v222 = vpack.c.bf16 %v212, %v210
        %v223 = vpack.c.bf16 %v213, %v211
        %v224 = vpack.c.bf16 %v216, %v214
        %v225 = vpack.c.bf16 %v217, %v215
        %v226 = vld [vmem:[%s178] sm:$0xff]
        %v227 = vld [vmem:[%s178 + $0x8] sm:$0xff]
        %v228 = vld [vmem:[%s178 + $0x10] sm:$0xff]
        %v229 = vld [vmem:[%s178 + $0x18] sm:$0xff]
        %v230 = vld [vmem:[%s178 + $0x20] sm:$0xff]
        %v231 = vld [vmem:[%s178 + $0x28] sm:$0xff]
        %v232 = vld [vmem:[%s178 + $0x30] sm:$0xff]
        %v233 = vld [vmem:[%s178 + $0x38] sm:$0xff]
        %v234 = vld [vmem:[%s178 + $0x40] sm:$0xff]
        %v235 = vld [vmem:[%s178 + $0x48] sm:$0xff]
        %v236 = vld [vmem:[%s178 + $0x50] sm:$0xff]
        %v237 = vld [vmem:[%s178 + $0x58] sm:$0xff]
        %v238 = vld [vmem:[%s178 + $0x60] sm:$0xff]
        %v239 = vld [vmem:[%s178 + $0x68] sm:$0xff]
        %v240 = vld [vmem:[%s178 + $0x70] sm:$0xff]
        %v241 = vld [vmem:[%s178 + $0x78] sm:$0xff]
        %v242 = vld [vmem:[%s178 + $0x80] sm:$0xff]
        %v243 = vld [vmem:[%s178 + $0x88] sm:$0xff]
        %v244 = vld [vmem:[%s178 + $0x90] sm:$0xff]
        %v245 = vld [vmem:[%s178 + $0x98] sm:$0xff]
        %v246 = vld [vmem:[%s178 + $0xa0] sm:$0xff]
        %v247 = vld [vmem:[%s178 + $0xa8] sm:$0xff]
        %v248 = vld [vmem:[%s178 + $0xb0] sm:$0xff]
        %v249 = vld [vmem:[%s178 + $0xb8] sm:$0xff]
        %v250 = vld [vmem:[%s178 + $0xc0] sm:$0xff]
        %v251 = vld [vmem:[%s178 + $0xc8] sm:$0xff]
        %v252 = vld [vmem:[%s178 + $0xd0] sm:$0xff]
        %v253 = vld [vmem:[%s178 + $0xd8] sm:$0xff]
        %v254 = vld [vmem:[%s178 + $0xe0] sm:$0xff]
        %v255 = vld [vmem:[%s178 + $0xe8] sm:$0xff]
        %v256 = vld [vmem:[%s178 + $0xf0] sm:$0xff]
        %v257 = vld [vmem:[%s178 + $0xf8] sm:$0xff]
        %v258 = vpack.c.bf16 %v227, %v226
        %v259 = vpack.c.bf16 %v229, %v228
        %v260 = vpack.c.bf16 %v231, %v230
        %v261 = vpack.c.bf16 %v233, %v232
        %v262 = vpack.c.bf16 %v235, %v234
        %v263 = vpack.c.bf16 %v237, %v236
        %v264 = vpack.c.bf16 %v239, %v238
        %v265 = vpack.c.bf16 %v241, %v240
        %v266 = vpack.c.bf16 %v243, %v242
        %v267 = vpack.c.bf16 %v245, %v244
        %v268 = vpack.c.bf16 %v247, %v246
        %v269 = vpack.c.bf16 %v249, %v248
        %v270 = vpack.c.bf16 %v251, %v250
        %v271 = vpack.c.bf16 %v253, %v252
        %v272 = vpack.c.bf16 %v255, %v254
        %v273 = vpack.c.bf16 %v257, %v256
        %274 = vmatprep.subr.bf16.mxu0 0
        %275 = vmatpush1.bf16.msra.mxu0 %v265
        %276 = vmatprep.subr.bf16.mxu0 0
        %277 = vmatpush1.bf16.msra.mxu0 %v264
        %278 = vmatprep.subr.bf16.mxu0 0
        %279 = vmatpush1.bf16.msra.mxu0 %v263
        %280 = vmatprep.subr.bf16.mxu0 0
        %281 = vmatpush1.bf16.msra.mxu0 %v262
        %282 = vmatprep.subr.bf16.mxu0 0
        %283 = vmatpush1.bf16.msra.mxu0 %v261
        %284 = vmatprep.subr.bf16.mxu0 0
        %285 = vmatpush1.bf16.msra.mxu0 %v260
        %286 = vmatprep.subr.bf16.mxu0 0
        %287 = vmatpush1.bf16.msra.mxu0 %v259
        %288 = vmatprep.subr.bf16.mxu0 0
        %289 = vmatpush1.bf16.msra.mxu0 %v258
        %290 = vmatprep.subr.bf16.mxu0 0
        %291 = vmatpush2.bf16.msra.mxu0 %v273
        %292 = vmatprep.subr.bf16.mxu0 0
        %293 = vmatpush2.bf16.msra.mxu0 %v272
        %294 = vmatprep.subr.bf16.mxu0 0
        %295 = vmatpush2.bf16.msra.mxu0 %v271
        %296 = vmatprep.subr.bf16.mxu0 0
        %297 = vmatpush2.bf16.msra.mxu0 %v270
        %298 = vmatprep.subr.bf16.mxu0 0
        %299 = vmatpush2.bf16.msra.mxu0 %v269
        %300 = vmatprep.subr.bf16.mxu0 0
        %301 = vmatpush2.bf16.msra.mxu0 %v268
        %302 = vmatprep.subr.bf16.mxu0 0
        %303 = vmatpush2.bf16.msra.mxu0 %v267
        %304 = vmatprep.subr.bf16.mxu0 0
        %305 = vmatpush2.bf16.msra.mxu0 %v266
        %306 = vmatprep.mubr.bf16.mxu0 %v219
        %307 = vmatmul.mubr.bf16.gmra.mxu0 %v218
        %v308 = vpop.f32.mrf.mxu0
        %v309 = vadd.f32 0.0, %v308
        %v310 = vpop.f32.mrf.mxu0
        %v311 = vpop.f32.mrf.mxu0
        %v312 = vadd.f32 0.0, %v311
        %v313 = vpop.f32.mrf.mxu0
        %314 = vmatprep.mubr.bf16.mxu0 %v221
        %315 = vmatmul.mubr.bf16.gmra.mxu0 %v220
        %v316 = vpop.f32.mrf.mxu0
        %v317 = vadd.f32 0.0, %v316
        %v318 = vpop.f32.mrf.mxu0
        %v319 = vpop.f32.mrf.mxu0
        %v320 = vadd.f32 0.0, %v319
        %v321 = vpop.f32.mrf.mxu0
        %322 = vmatprep.mubr.bf16.mxu0 %v223
        %323 = vmatmul.mubr.bf16.gmra.mxu0 %v222
        %v324 = vpop.f32.mrf.mxu0
        %v325 = vadd.f32 0.0, %v324
        %v326 = vpop.f32.mrf.mxu0
        %v327 = vpop.f32.mrf.mxu0
        %v328 = vadd.f32 0.0, %v327
        %v329 = vpop.f32.mrf.mxu0
        %330 = vmatprep.mubr.bf16.mxu0 %v225
        %331 = vmatmul.mubr.bf16.gmra.mxu0 %v224
        %v332 = vpop.f32.mrf.mxu0
        %v333 = vadd.f32 0.0, %v332
        %v334 = vpop.f32.mrf.mxu0
        %v335 = vpop.f32.mrf.mxu0
        %v336 = vadd.f32 0.0, %v335
        %v337 = vpop.f32.mrf.mxu0
        %338 = vdwg.mxu0
        %339 = vst [vmem:[%s198] sm:$0xff] %v309
        %340 = vst [vmem:[%s198 + $0x8] sm:$0xff] %v312
        %341 = vst [vmem:[%s198 + $0x10] sm:$0xff] %v317
        %342 = vst [vmem:[%s198 + $0x18] sm:$0xff] %v320
        %343 = vst [vmem:[%s198 + $0x20] sm:$0xff] %v325
        %344 = vst [vmem:[%s198 + $0x28] sm:$0xff] %v328
        %345 = vst [vmem:[%s198 + $0x30] sm:$0xff] %v333
        %346 = vst [vmem:[%s198 + $0x38] sm:$0xff] %v336
        %s347 = sand.u32 %s94, 1
        %s348 = scalar_lea.sflag [#allocation4], %s347
        %s349 = sand.u32 %s94, 1
        %s350 = smul.addr %s349, 64
        %s351 = scalar_lea.vmem [#allocation7], %s350
        // Predicated region
        $region37: #{linear_generator_forward.1} parent=27 // pred_check
          %p352 = pneg %p104
        $region38: #{linear_generator_forward.1} parent=27 // pred_check_branch
          %354 = sbr.rel (%p352) target = $region40
        $region39: #{linear_generator_forward.1} parent=27 // pred_region
          %s355 = smul.u32 8, %s24
          %s357 = ssub.s32 1024, 1024
          %358 = vsyncadd %s348, %s357
          %s359 = smul.addr %s355, 2
          %s360 = sadd.s32 %s25, %s359
          %s361 = smul.addr %s360, 128
          %s362 = scalar_lea.hbm %s2, %s361
          %s363 = sshll.u32 %s351, 4
          %s364 = int_to_ptr.vmem [resolvable:$true] %s363
          %369 = dma.vmem_to_hbm [thread:$0]  %s364, 1024, %s362, %s348, 128, 256, 8
        $region40: #{linear_generator_forward.1} parent=27 // pred_fallthru
          _
      $region28: #{linear_generator_forward.1} parent=5 // pred_fallthru
        _
      %p370 = scmp.le.s32.totalorder 2, %s15
      // Predicated region
      $region41: #{linear_generator_forward.1} parent=5 // pred_check
        %p371 = pneg %p370
      $region42: #{linear_generator_forward.1} parent=5 // pred_check_branch
        %373 = sbr.rel (%p371) target = $region44
      $region43: #{linear_generator_forward.1} parent=5 // pred_region
        %s374 = ssub.s32 %s15, 2
        // Predicated region
        $region45: #{linear_generator_forward.1} parent=43 // pred_check
          %p375 = pneg %p110
        $region46: #{linear_generator_forward.1} parent=43 // pred_check_branch
          %377 = sbr.rel (%p375) target = $region48
        $region47: #{linear_generator_forward.1} parent=43 // pred_region
          %s378 = sand.u32 %s95, 1
          %s379 = scalar_lea.sflag [#allocation4], %s378
          %s380 = sand.u32 %s95, 1
          %s381 = smul.addr %s380, 64
          %s382 = scalar_lea.vmem [#allocation7], %s381
          %383 = dma.done %s379, 1024
        $region48: #{linear_generator_forward.1} parent=43 // pred_fallthru
          _
      $region44: #{linear_generator_forward.1} parent=5 // pred_fallthru
        _
    $region6: #{linear_generator_forward.1} parent=1 // loop_footer
      %s19 = sadd.s32 1, %s15
    $region7: #{linear_generator_forward.1} parent=1 // loop_footer_branch
      %14 = sbr.rel target = $region3
    $region8: #{linear_generator_forward.1} parent=1 // loop_exit
      _
    %384 = vsyncpa [#allocation3], 1
    %s385 = scalar_lea.sflag [#allocation3], 1
    %386 = vsyncpa %s385, 1
    %387 = vsyncpa [#allocation6], 1
    %s388 = scalar_lea.sflag [#allocation6], 1
    %389 = vsyncpa %s388, 1
    %390 = vsyncpa [#allocation4], 1
    %s391 = scalar_lea.sflag [#allocation4], 1
    %392 = vsyncpa %s391, 1

</llo_original>
